<compile_context>
chip_gen: v6e
topology: v6e:2x2x1
jax: 0.10.0
libtpu: 0.0.40
codegen_flags: <defaults>
</compile_context>

<pallas_src>
import jax
import jax.numpy as jnp
from jax.experimental import pallas as pl
from jax.experimental.pallas import tpu as pltpu

_SUBLANE = 8      # f32 sublane tile
_LANE = 128       # lane tile
_MAX_TILE_H = 512 # ~85% of HBM roofline per measured tiled-copy data


def _round_up(x: int, m: int) -> int:
    return ((x + m - 1) // m) * m


def _vmem_limit_bytes() -> int:
    """Generation-aware scoped-VMEM request: 75% of physical capacity
    (v5e/v6e: 128 MiB -> 96 MiB, v7x: 64 MiB -> 48 MiB), capped at 96 MiB,
    with a safe 48 MiB fallback if the query is unavailable."""
    try:
        cap = int(pltpu.get_tpu_info().vmem_capacity_bytes)
    except Exception:
        cap = 64 * 1024 * 1024
    return min((cap * 3) // 4, 96 * 1024 * 1024)


def _pick_tile_h(oh: int, w_pad: int, ow_pad: int, halo_rows: int,
                 vmem_limit: int) -> int:
    """Largest row tile whose f32 working set (double-buffered input block +
    double-buffered output tile + halo strip + assembly scratch) fits in ~70%
    of the requested scoped VMEM (headroom for compiler temporaries)."""
    unit = max(_SUBLANE, halo_rows)
    budget = (vmem_limit * 7) // 10
    fixed = 4 * 3 * halo_rows * w_pad               # halo strip: 2 bufs + scratch tail
    per_row = 4 * (3 * w_pad + 2 * ow_pad)          # input 2x + scratch 1x + output 2x
    th = (max(budget - fixed, per_row * unit) // per_row) // unit * unit
    th = min(max(th, unit), _MAX_TILE_H)
    oh8 = _round_up(oh, _SUBLANE)
    return oh8 if th >= oh8 else th


def _make_kernel(kh, kw, tile_h, ow_pad, halo_rows, use_halo_input):
    if use_halo_input:
        def kernel(w_ref, b_ref, xb_ref, xh_ref, o_ref, xs_ref):
            # Assemble body rows + next-tile halo strip once per step (a single
            # extra slab pass); the tap reads below are then load-only.
            xs_ref[pl.ds(0, tile_h), :] = xb_ref[...]
            xs_ref[pl.ds(tile_h, halo_rows), :] = xh_ref[...]
            # Bias folded into the accumulator init (saves a full-tile add).
            acc = jnp.full((tile_h, ow_pad), b_ref[0], dtype=jnp.float32)
            for p in range(kh):                      # static unroll: kernels are tiny
                for q in range(kw):
                    acc = acc + (xs_ref[pl.ds(p, tile_h), pl.ds(q, ow_pad)]
                                 * w_ref[p, q])
            o_ref[...] = acc                         # single unmasked lane-dense store
    else:
        def kernel(w_ref, b_ref, x_ref, o_ref):
            acc = jnp.full((tile_h, ow_pad), b_ref[0], dtype=jnp.float32)
            for p in range(kh):
                for q in range(kw):
                    acc = acc + (x_ref[pl.ds(p, tile_h), pl.ds(q, ow_pad)]
                                 * w_ref[p, q])
            o_ref[...] = acc
    return kernel


def conv2d_pallas(x, weight, bias, *, tile_h=None):
    """Cross-correlation of 2-D `x` with 2-D `weight`, plus scalar bias.

    x:      (H, W)   float32
    weight: (kh, kw) float32
    bias:   (1,)     float32
    returns (H - kh + 1, W - kw + 1) float32
    """
    x = jnp.asarray(x, jnp.float32)
    weight = jnp.asarray(weight, jnp.float32)
    bias = jnp.asarray(bias, jnp.float32).reshape((1,))

    H, W = x.shape
    kh, kw = weight.shape
    if H < kh or W < kw:
        raise ValueError("input smaller than kernel")
    oh, ow = H - kh + 1, W - kw + 1

    # Lane-dense output tiles; input padded to exactly the columns the tap
    # offset reads touch (no wasted 128-lane width halo).
    ow_pad = _round_up(ow, _LANE)
    w_pad = ow_pad + (kw - 1)
    halo_rows = 0 if kh == 1 else _round_up(kh - 1, _SUBLANE)
    unit = max(_SUBLANE, halo_rows)

    vmem_limit = _vmem_limit_bytes()

    oh8 = _round_up(oh, _SUBLANE)
    if tile_h is None:
        tile_h = _pick_tile_h(oh, w_pad, ow_pad, halo_rows, vmem_limit)
    else:
        tile_h = max(unit, _round_up(int(tile_h), unit))
    if tile_h >= oh8:
        tile_h = oh8                                  # single row tile

    oh_pad = _round_up(oh, tile_h)
    grid_h = oh_pad // tile_h
    use_halo_input = (grid_h > 1) and (kh > 1)

    # Zero padding only ever feeds output rows/cols that are sliced off below,
    # so exact corr2d semantics are preserved.
    h_pad = oh_pad + halo_rows
    x_pad = jnp.pad(x, ((0, h_pad - H), (0, w_pad - W)))

    if use_halo_input:
        halo_block_stride = tile_h // halo_rows       # tile_h % halo_rows == 0
        x_specs = [
            pl.BlockSpec((tile_h, w_pad), lambda i: (i, 0)),
            pl.BlockSpec((halo_rows, w_pad),
                         lambda i: ((i + 1) * halo_block_stride, 0)),
        ]
        inputs = (weight, bias, x_pad, x_pad)
        scratch_shapes = [pltpu.VMEM((tile_h + halo_rows, w_pad), jnp.float32)]
    else:
        block_rows = tile_h + halo_rows if grid_h == 1 else tile_h
        x_specs = [pl.BlockSpec((block_rows, w_pad), lambda i: (i, 0))]
        inputs = (weight, bias, x_pad)
        scratch_shapes = []

    kernel = _make_kernel(kh, kw, tile_h, ow_pad, halo_rows, use_halo_input)

    cost = pl.CostEstimate(
        flops=int(2 * kh * kw * oh * ow),
        transcendentals=0,
        bytes_accessed=int(4 * (H * W + oh * ow + kh * kw + 1)),
    )

    out_pad = pl.pallas_call(
        kernel,
        out_shape=jax.ShapeDtypeStruct((oh_pad, ow_pad), jnp.float32),
        grid=(grid_h,),
        in_specs=[
            pl.BlockSpec(memory_space=pltpu.SMEM),    # weight taps (scalars)
            pl.BlockSpec(memory_space=pltpu.SMEM),    # bias (scalar)
            *x_specs,
        ],
        out_specs=pl.BlockSpec((tile_h, ow_pad), lambda i: (i, 0)),
        scratch_shapes=scratch_shapes,
        compiler_params=pltpu.CompilerParams(
            # Row tiles are independent.  (On v7x, CORE_PARALLEL / core_map
            # would split them across the two TensorCores; "parallel" is kept
            # here for portability across v5e/v6e/v7x lowerings.)
            dimension_semantics=("parallel",),
            vmem_limit_bytes=int(vmem_limit),
        ),
        cost_estimate=cost,
    )(*inputs)

    return out_pad[:oh, :ow]


def corr2d_ref(x, k, b):
    """Pure-JAX reference: identical math to the PyTorch corr2d double loop
    (vectorized per tap so larger tests stay fast), plus the scalar bias."""
    kh, kw = k.shape
    oh, ow = x.shape[0] - kh + 1, x.shape[1] - kw + 1
    out = jnp.zeros((oh, ow), jnp.float32)
    for p in range(kh):
        for q in range(kw):
            out = out + x[p:p + oh, q:q + ow] * k[p, q]
    return out + b[0]


if __name__ == "__main__":
    keys = jax.random.split(jax.random.PRNGKey(0), 10)

    # --- Test 1: the d2l Conv2D module setup: X (6, 8), kernel_size (1, 2),
    #     weight ~ U[0,1) (torch.rand), bias = zeros(1). ---------------------
    X = jnp.ones((6, 8), dtype=jnp.float32).at[:, 2:6].set(0.0)
    w1 = jax.random.uniform(keys[0], (1, 2), dtype=jnp.float32)
    b1 = jnp.zeros((1,), dtype=jnp.float32)
    out1 = jax.block_until_ready(conv2d_pallas(X, w1, b1))
    ref1 = corr2d_ref(X, w1, b1)
    assert out1.shape == (6, 7)
    assert jnp.allclose(out1, ref1, atol=1e-5, rtol=1e-5)

    # --- Test 2: the classic edge-detection kernel K = [[1, -1]]. -----------
    K = jnp.array([[1.0, -1.0]], dtype=jnp.float32)
    out2 = jax.block_until_ready(conv2d_pallas(X, K, jnp.zeros((1,), jnp.float32)))
    expected2 = jnp.zeros((6, 7), jnp.float32).at[:, 1].set(1.0).at[:, 5].set(-1.0)
    assert jnp.allclose(out2, expected2, atol=1e-5, rtol=1e-5)

    # --- Test 3: kh > 1 AND multiple row tiles: exercises the two-input
    #     body + halo-strip path (tile_h=16 -> grid_h=3 at this shape). ------
    x3 = jax.random.normal(keys[1], (40, 150), dtype=jnp.float32)
    w3 = jax.random.uniform(keys[2], (3, 4), dtype=jnp.float32)
    b3 = jax.random.normal(keys[3], (1,), dtype=jnp.float32)
    out3 = jax.block_until_ready(conv2d_pallas(x3, w3, b3, tile_h=16))
    ref3 = corr2d_ref(x3, w3, b3)
    assert out3.shape == ref3.shape == (38, 147)
    assert jnp.allclose(out3, ref3, atol=1e-4, rtol=1e-4)

    # --- Test 4: kh > 1, single tile (default tile_h; halo rows live inside
    #     the one input block). ----------------------------------------------
    x4 = jax.random.normal(keys[4], (20, 90), dtype=jnp.float32)
    w4 = jax.random.uniform(keys[5], (3, 4), dtype=jnp.float32)
    b4 = jax.random.normal(keys[6], (1,), dtype=jnp.float32)
    out4 = jax.block_until_ready(conv2d_pallas(x4, w4, b4))
    ref4 = corr2d_ref(x4, w4, b4)
    assert out4.shape == ref4.shape == (18, 87)
    assert jnp.allclose(out4, ref4, atol=1e-4, rtol=1e-4)

    # --- Test 5: kh == 1 with multiple row tiles (no halo input). -----------
    x5 = jax.random.normal(keys[7], (40, 150), dtype=jnp.float32)
    w5 = jax.random.uniform(keys[8], (1, 5), dtype=jnp.float32)
    b5 = jax.random.normal(keys[9], (1,), dtype=jnp.float32)
    out5 = jax.block_until_ready(conv2d_pallas(x5, w5, b5, tile_h=16))
    ref5 = corr2d_ref(x5, w5, b5)
    assert out5.shape == ref5.shape == (40, 146)
    assert jnp.allclose(out5, ref5, atol=1e-4, rtol=1e-4)

    # --- Test 6: default tile sizing with a multi-tile grid + halo path
    #     (oh > 512 so the auto-picked 512-row tile yields grid_h = 2). ------
    x6 = jax.random.normal(keys[1], (600, 200), dtype=jnp.float32)
    w6 = jax.random.uniform(keys[2], (2, 2), dtype=jnp.float32)
    b6 = jax.random.normal(keys[3], (1,), dtype=jnp.float32)
    out6 = jax.block_until_ready(conv2d_pallas(x6, w6, b6))
    ref6 = corr2d_ref(x6, w6, b6)
    assert out6.shape == ref6.shape == (599, 199)
    assert jnp.allclose(out6, ref6, atol=1e-4, rtol=1e-4)

    print("KERNEL_OK")
</pallas_src>

<mosaic_0001>
module attributes {stable_mosaic.version = 11 : i64} {
  func.func @kernel(%arg0: i32, %arg1: memref<1x2xf32, #tpu.memory_space<smem>>, %arg2: memref<1xf32, #tpu.memory_space<smem>>, %arg3: memref<8x129xf32, #tpu.memory_space<vmem>>, %arg4: memref<8x128xf32, #tpu.memory_space<vmem>>) attributes {dimension_semantics = [#tpu.dimension_semantics<parallel>], iteration_bounds = array<i64: 1>, scalar_prefetch = 0 : i64, scratch_operands = 0 : i64, tpu.core_type = #tpu.core_type<tc>, window_params = [{transform_indices = @transform_0, window_bounds = array<i64: 1, 2>}, {transform_indices = @transform_1, window_bounds = array<i64: 1>}, {transform_indices = @transform_2, window_bounds = array<i64: 8, 129>}, {transform_indices = @transform_3, window_bounds = array<i64: 8, 128>}]} {
    %c0 = arith.constant 0 : index
    %0 = memref.load %arg2[%c0] : memref<1xf32, #tpu.memory_space<smem>>
    %1 = vector.broadcast %0 : f32 to vector<8x128xf32>
    %c0_0 = arith.constant 0 : index
    %c0_1 = arith.constant 0 : index
    %2 = vector.load %arg3[%c0_0, %c0_1] : memref<8x129xf32, #tpu.memory_space<vmem>>, vector<8x128xf32>
    %c0_2 = arith.constant 0 : index
    %c0_3 = arith.constant 0 : index
    %3 = memref.load %arg1[%c0_2, %c0_3] : memref<1x2xf32, #tpu.memory_space<smem>>
    %4 = vector.broadcast %3 : f32 to vector<8x128xf32>
    %5 = arith.mulf %2, %4 : vector<8x128xf32>
    %6 = arith.addf %1, %5 : vector<8x128xf32>
    %c0_4 = arith.constant 0 : index
    %c1 = arith.constant 1 : index
    %7 = vector.load %arg3[%c0_4, %c1] : memref<8x129xf32, #tpu.memory_space<vmem>>, vector<8x128xf32>
    %c0_5 = arith.constant 0 : index
    %c1_6 = arith.constant 1 : index
    %8 = memref.load %arg1[%c0_5, %c1_6] : memref<1x2xf32, #tpu.memory_space<smem>>
    %9 = vector.broadcast %8 : f32 to vector<8x128xf32>
    %10 = arith.mulf %7, %9 : vector<8x128xf32>
    %11 = arith.addf %6, %10 : vector<8x128xf32>
    %c0_7 = arith.constant 0 : index
    %c0_8 = arith.constant 0 : index
    %12 = vector.load %arg4[%c0_7, %c0_8] : memref<8x128xf32, #tpu.memory_space<vmem>>, vector<8x128xf32>
    tpu.vector_store %arg4[%c0_7, %c0_8], %11 {strides = array<i32>} : memref<8x128xf32, #tpu.memory_space<vmem>>, vector<8x128xf32>,
    return
  }
  func.func @transform_0(%arg0: i32) -> (i32, i32) {
    %c0_i32 = arith.constant 0 : i32
    %c0_i32_0 = arith.constant 0 : i32
    %c0_i32_1 = arith.constant 0 : i32
    return %c0_i32, %c0_i32_0 : i32, i32
  }
  func.func @transform_1(%arg0: i32) -> i32 {
    %c0_i32 = arith.constant 0 : i32
    %c0_i32_0 = arith.constant 0 : i32
    return %c0_i32 : i32
  }
  func.func @transform_2(%arg0: i32) -> (i32, i32) {
    %c0_i32 = arith.constant 0 : i32
    %c0_i32_0 = arith.constant 0 : i32
    return %arg0, %c0_i32 : i32, i32
  }
  func.func @transform_3(%arg0: i32) -> (i32, i32) {
    %c0_i32 = arith.constant 0 : i32
    %c0_i32_0 = arith.constant 0 : i32
    return %arg0, %c0_i32 : i32, i32
  }
}

</mosaic_0001>

<llo_original>
// kernel: tpu_custom_call.1
$region0: #{tpu_custom_call.1}
  #allocation0 [shape = 'u32[]', space=smem, size = 0x4, offset = 0x4, fixed_abs, tag = 'smem constant byte address 0x4 - core index']
  #allocation1 [shape = 'u32[144,128]{1,0:T(1,128)}', space=vmem, size = 0x12000, scoped, tag = 'internal scratch']
  #allocation2 [shape = 'f32[1]{0:T(128)S(6)}', space=smem, size = 0x200, scoped, tag = 'scoped memory for tpu_custom_call.1']
  %s0 = inlined_call_operand.vmem [shape: f32[1,2], index: 0, kind: input, shape index: {}]
  %s1 = inlined_call_operand.<no memory space> [shape: f32[1], index: 1, kind: input, shape index: {}]
  %s2 = inlined_call_operand.hbm [shape: f32[8,129], index: 2, kind: input, shape index: {}]
  %s3 = inlined_call_operand.hbm [shape: f32[8,128], index: 3, kind: output, shape index: {}]
  %s4 = sld [smem:[#allocation0]]
  $region30: #{tpu_custom_call.1} parent=0
    _
  %s6 = ssub.s32 1, %s4
  %s7 = scalar_select 0, %s6, %s4
  %8 = sst [smem:[#allocation2]] %s1
  $region1: #{tpu_custom_call.1} parent=0
    #allocation3 [shape = 'u8[512]{0}', space=smem, size = 0x200, scoped, tag = 'input window, operand 0, single buffered']
    #allocation4 [shape = 's32[1]{0}', space=sflag, size = 0x4, scoped, tag = 'scoped memory for tpu_custom_call.1']
    #allocation5 [shape = 's32[1]{0}', space=sflag, size = 0x4, scoped, tag = 'scoped memory for tpu_custom_call.1']
    #allocation6 [shape = 's32[1]{0}', space=sflag, size = 0x4, scoped, tag = 'scoped memory for tpu_custom_call.1']
    #allocation7 [shape = 'u8[8192]{0}', space=vmem, size = 0x2000, scoped, tag = 'input window, operand 2, single buffered']
    #allocation8 [shape = 'u8[4096]{0}', space=vmem, size = 0x1000, scoped, tag = 'output window, operand 0, single buffered']
    %9 = vsyncpa [#allocation6], 0
    %10 = vsyncpa [#allocation4], 0
    %11 = vsyncpa [#allocation5], 0
    // Predicated region
    $region2: #{tpu_custom_call.1} parent=1 // pred_check
      _
    $region3: #{tpu_custom_call.1} parent=1 // pred_check_branch
      %13 = sbr.rel (0) target = $region5
    $region4: #{tpu_custom_call.1} parent=1 // pred_region
      %s15 = ssub.s32 16, 16
      %16 = vsyncadd [#allocation6], %s15
      %s18 = sshll.u32 %s0, 4
      %s19 = int_to_ptr.vmem [resolvable:$true] %s18
      %21 = dma.vmem_to_smem %s19, 16, [#allocation3], [#allocation6]
    $region5: #{tpu_custom_call.1} parent=1 // pred_fallthru
      _
    // Predicated region
    $region6: #{tpu_custom_call.1} parent=1 // pred_check
      _
    $region7: #{tpu_custom_call.1} parent=1 // pred_check_branch
      %23 = sbr.rel (0) target = $region9
    $region8: #{tpu_custom_call.1} parent=1 // pred_region
      _
    $region9: #{tpu_custom_call.1} parent=1 // pred_fallthru
      _
    // Predicated region
    $region10: #{tpu_custom_call.1} parent=1 // pred_check
      _
    $region11: #{tpu_custom_call.1} parent=1 // pred_check_branch
      %25 = sbr.rel (0) target = $region13
    $region12: #{tpu_custom_call.1} parent=1 // pred_region
      %s27 = ssub.s32 256, 256
      %28 = vsyncadd [#allocation4], %s27
      %s30 = sshll.u32 [#allocation7], 4
      %s31 = int_to_ptr.vmem [resolvable:$true] %s30
      %33 = dma.hbm_to_vmem [thread:$0]  %s2, 256, %s31, [#allocation4]
    $region13: #{tpu_custom_call.1} parent=1 // pred_fallthru
      _
    // Predicated region
    $region14: #{tpu_custom_call.1} parent=1 // pred_check
      _
    $region15: #{tpu_custom_call.1} parent=1 // pred_check_branch
      %35 = sbr.rel (0) target = $region17
    $region16: #{tpu_custom_call.1} parent=1 // pred_region
      %36 = dma.done [#allocation6], 16
    $region17: #{tpu_custom_call.1} parent=1 // pred_fallthru
      _
    // Predicated region
    $region18: #{tpu_custom_call.1} parent=1 // pred_check
      _
    $region19: #{tpu_custom_call.1} parent=1 // pred_check_branch
      %38 = sbr.rel (0) target = $region21
    $region20: #{tpu_custom_call.1} parent=1 // pred_region
      %39 = dma.done [#allocation4], 256
    $region21: #{tpu_custom_call.1} parent=1 // pred_fallthru
      _
    %40 = sfence
    %s41 = sld [smem:[#allocation2]]
    %v42 = vstv %s41
    %v43 = vld [vmem:[#allocation7] sm:$0xff]
    %s44 = sld [smem:[#allocation3]]
    %v45 = vstv %s44
    %v46 = vmul.f32 %v43, %v45
    %v47 = vadd.f32 %v42, %v46
    %v48 = vld [vmem:[#allocation7] sm:$0xff]
    %v49 = vld [vmem:[#allocation7 + $0x8] sm:$0xff]
    %s50 = sld [smem:[#allocation3 + $0x1]]
    %v51 = vstv %s50
    %v52 = vmul.f32 %v48, %v51
    %v53 = vmul.f32 %v49, %v51
    %56 = vrot.lane.b32.xlu0 %v52, 127
    %v57 = vpop.permute.xlu0 %56
    %58 = vrot.lane.b32.xlu0 %v53, 127
    %v59 = vpop.permute.xlu0 %58
    %vm60 = vcmask 1039360
    %v61 = vsel %vm60, %v57, %v59
    %v63 = vadd.f32 %v47, %v61
    %64 = vst [vmem:[#allocation8] sm:$0xff] %v63
    // Predicated region
    $region22: #{tpu_custom_call.1} parent=1 // pred_check
      _
    $region23: #{tpu_custom_call.1} parent=1 // pred_check_branch
      %66 = sbr.rel (0) target = $region25
    $region24: #{tpu_custom_call.1} parent=1 // pred_region
      %s68 = ssub.s32 128, 128
      %69 = vsyncadd [#allocation5], %s68
      %s71 = sshll.u32 [#allocation8], 4
      %s72 = int_to_ptr.vmem [resolvable:$true] %s71
      %74 = dma.vmem_to_hbm [thread:$0]  %s72, 128, %s3, [#allocation5]
    $region25: #{tpu_custom_call.1} parent=1 // pred_fallthru
      _
    // Predicated region
    $region26: #{tpu_custom_call.1} parent=1 // pred_check
      _
    $region27: #{tpu_custom_call.1} parent=1 // pred_check_branch
      %76 = sbr.rel (0) target = $region29
    $region28: #{tpu_custom_call.1} parent=1 // pred_region
      %77 = dma.done [#allocation5], 128
    $region29: #{tpu_custom_call.1} parent=1 // pred_fallthru
      _
    %78 = vsyncpa [#allocation4], 1
    %79 = vsyncpa [#allocation5], 1
    %80 = vsyncpa [#allocation6], 1

</llo_original>
